<compile_context>
chip_gen: v6e
topology: v6e:2x2x1
jax: 0.10.0
libtpu: 0.0.40
codegen_flags: <defaults>
</compile_context>

<pallas_src>
import jax
import jax.numpy as jnp
from jax import lax
from jax.experimental import pallas as pl
from jax.experimental.pallas import tpu as pltpu

VMEM_LIMIT = 32 * 1024 * 1024  # safe on v5e/v6e/v7x


# --------------------------------------------------------------------------
# conv3x3 (stride 1, pad 1) + bias + ReLU, NHWC, one im2col MXU matmul.
# --------------------------------------------------------------------------
def conv3x3_relu_kernel(x_ref, w_ref, b_ref, o_ref):
    # x_ref: (1, H, W, Cin) f32   w_ref: (9*Cin, Cout) bf16
    # b_ref: (1, Cout) f32        o_ref: (1, H, W, Cout) f32
    _, H, W, Cin = x_ref.shape
    Cout = w_ref.shape[1]
    x = x_ref[...]

    # Zero-pad H and W by 1 via border concatenation (no scratch memset).
    zr = jnp.zeros((1, 1, W, Cin), x.dtype)
    xp = jnp.concatenate([zr, x, zr], axis=1)            # (1, H+2, W,   Cin)
    zc = jnp.zeros((1, H + 2, 1, Cin), x.dtype)
    xp = jnp.concatenate([zc, xp, zc], axis=2)           # (1, H+2, W+2, Cin)

    # im2col: 9 shifted taps along the channel (lane) axis -> one matmul.
    taps = [xp[:, dy:dy + H, dx:dx + W, :]
            for dy in range(3) for dx in range(3)]
    patches = jnp.concatenate(taps, axis=-1)             # (1, H, W, 9*Cin)
    patches = patches.reshape(H * W, 9 * Cin).astype(jnp.bfloat16)

    y = jnp.dot(patches, w_ref[...], preferred_element_type=jnp.float32)
    y = jnp.maximum(y + b_ref[...], 0.0)                 # bias + ReLU in f32
    o_ref[...] = y.reshape(1, H, W, Cout).astype(o_ref.dtype)


def conv3x3_relu(x, w_hwio, b):
    N, H, W, Cin = x.shape
    Cout = w_hwio.shape[-1]
    w2d = w_hwio.reshape(9 * Cin, Cout).astype(jnp.bfloat16)
    b2d = b.reshape(1, Cout).astype(jnp.float32)
    flops = 2 * N * H * W * 9 * Cin * Cout
    bytes_accessed = (N * H * W * Cin * 4 + w2d.size * 2 + b2d.size * 4
                      + N * H * W * Cout * 4)
    return pl.pallas_call(
        conv3x3_relu_kernel,
        out_shape=jax.ShapeDtypeStruct((N, H, W, Cout), jnp.float32),
        grid_spec=pltpu.PrefetchScalarGridSpec(
            num_scalar_prefetch=0,
            grid=(N,),
            in_specs=[
                pl.BlockSpec((1, H, W, Cin), lambda n: (n, 0, 0, 0)),
                pl.BlockSpec((9 * Cin, Cout), lambda n: (0, 0)),   # resident
                pl.BlockSpec((1, Cout), lambda n: (0, 0)),         # resident
            ],
            out_specs=pl.BlockSpec((1, H, W, Cout), lambda n: (n, 0, 0, 0)),
        ),
        compiler_params=pltpu.CompilerParams(
            dimension_semantics=("parallel",),
            vmem_limit_bytes=VMEM_LIMIT),
        cost_estimate=pl.CostEstimate(flops=flops, transcendentals=0,
                                      bytes_accessed=bytes_accessed),
    )(x, w2d, b2d)


# --------------------------------------------------------------------------
# 2x2 max pool, stride 2, NHWC (elementwise maxima of slices, no reductions).
# --------------------------------------------------------------------------
def maxpool2x2_kernel(x_ref, o_ref):
    _, H, W, C = x_ref.shape
    for i in range(H // 2):
        for j in range(W // 2):
            win = x_ref[:, 2 * i:2 * i + 2, 2 * j:2 * j + 2, :]        # (1,2,2,C)
            m = jnp.maximum(win[:, 0:1, :, :], win[:, 1:2, :, :])      # (1,1,2,C)
            m = jnp.maximum(m[:, :, 0:1, :], m[:, :, 1:2, :])          # (1,1,1,C)
            o_ref[:, i:i + 1, j:j + 1, :] = m


def maxpool2x2(x):
    N, H, W, C = x.shape
    Ho, Wo = H // 2, W // 2
    return pl.pallas_call(
        maxpool2x2_kernel,
        out_shape=jax.ShapeDtypeStruct((N, Ho, Wo, C), x.dtype),
        grid_spec=pltpu.PrefetchScalarGridSpec(
            num_scalar_prefetch=0,
            grid=(N,),
            in_specs=[pl.BlockSpec((1, H, W, C), lambda n: (n, 0, 0, 0))],
            out_specs=pl.BlockSpec((1, Ho, Wo, C), lambda n: (n, 0, 0, 0)),
        ),
        compiler_params=pltpu.CompilerParams(
            dimension_semantics=("parallel",),
            vmem_limit_bytes=VMEM_LIMIT),
    )(x)


# --------------------------------------------------------------------------
# Classifier: Linear(512,512)+ReLU (+Dropout) x2, Linear(512,num_classes),
# fused into one kernel, output padded to 128 lanes (lane-dense store).
# --------------------------------------------------------------------------
def classifier_kernel(x_ref, w1_ref, b1_ref, w2_ref, b2_ref, w3_ref, b3_ref, o_ref):
    h = jnp.dot(x_ref[...].astype(jnp.bfloat16), w1_ref[...],
                preferred_element_type=jnp.float32) + b1_ref[...]
    h = jnp.maximum(h, 0.0)
    # TODO(synk): nn.Dropout is applied as identity (eval semantics); training-mode
    # dropout would use pltpu.prng_seed / pltpu.prng_random_bits.
    h = jnp.dot(h.astype(jnp.bfloat16), w2_ref[...],
                preferred_element_type=jnp.float32) + b2_ref[...]
    h = jnp.maximum(h, 0.0)
    y = jnp.dot(h.astype(jnp.bfloat16), w3_ref[...],
                preferred_element_type=jnp.float32) + b3_ref[...]
    o_ref[...] = y.astype(o_ref.dtype)


def classifier(x, w1, b1, w2, b2, w3, b3, num_classes):
    N, D = x.shape
    H1 = w1.shape[1]
    Cp = ((num_classes + 127) // 128) * 128             # lane-dense padded classes
    w3p = jnp.zeros((H1, Cp), jnp.float32).at[:, :num_classes].set(w3)
    b3p = jnp.zeros((1, Cp), jnp.float32).at[:, :num_classes].set(b3)

    bn = N  # row tile; tiny here (use multiples of 8, up to ~1024, for large N)
    flops = 2 * N * (D * H1 + H1 * H1 + H1 * Cp)
    bytes_accessed = (N * D * 4 + (D * H1 + H1 * H1 + H1 * Cp) * 2
                      + (2 * H1 + Cp) * 4 + N * Cp * 4)
    out = pl.pallas_call(
        classifier_kernel,
        out_shape=jax.ShapeDtypeStruct((N, Cp), jnp.float32),
        grid_spec=pltpu.PrefetchScalarGridSpec(
            num_scalar_prefetch=0,
            grid=(pl.cdiv(N, bn),),
            in_specs=[
                pl.BlockSpec((bn, D), lambda i: (i, 0)),
                pl.BlockSpec((D, H1), lambda i: (0, 0)),
                pl.BlockSpec((1, H1), lambda i: (0, 0)),
                pl.BlockSpec((H1, H1), lambda i: (0, 0)),
                pl.BlockSpec((1, H1), lambda i: (0, 0)),
                pl.BlockSpec((H1, Cp), lambda i: (0, 0)),
                pl.BlockSpec((1, Cp), lambda i: (0, 0)),
            ],
            out_specs=pl.BlockSpec((bn, Cp), lambda i: (i, 0)),
        ),
        compiler_params=pltpu.CompilerParams(
            dimension_semantics=("parallel",),
            vmem_limit_bytes=VMEM_LIMIT),
        cost_estimate=pl.CostEstimate(flops=flops, transcendentals=0,
                                      bytes_accessed=bytes_accessed),
    )(x,
      w1.astype(jnp.bfloat16), b1.reshape(1, H1).astype(jnp.float32),
      w2.astype(jnp.bfloat16), b2.reshape(1, H1).astype(jnp.float32),
      w3p.astype(jnp.bfloat16), b3p)
    return out[:, :num_classes]


# --------------------------------------------------------------------------
# Full VGG forward (PyTorch NCHW input at the boundary).
# --------------------------------------------------------------------------
def vgg_forward(x_nchw, p):
    x = jnp.transpose(x_nchw, (0, 2, 3, 1))       # NCHW -> NHWC (layout plumbing)
    y = conv3x3_relu(x, p["wc1"], p["bc1"])
    y = maxpool2x2(y)
    y = conv3x3_relu(y, p["wc2"], p["bc2"])
    y = maxpool2x2(y)                             # (N, 1, 1, 512)
    feat = y.reshape(y.shape[0], -1)              # x.view(N, -1)
    return classifier(feat, p["w1"], p["b1"], p["w2"], p["b2"],
                      p["w3"], p["b3"], p["num_classes"])


# --------------------------------------------------------------------------
# Pure-JAX reference (f32 throughout).
# --------------------------------------------------------------------------
def reference_forward(x_nchw, p):
    x = jnp.transpose(x_nchw, (0, 2, 3, 1))
    dn = ("NHWC", "HWIO", "NHWC")

    def conv(y, w, b):
        y = lax.conv_general_dilated(y, w, (1, 1), "SAME", dimension_numbers=dn)
        return jnp.maximum(y + b.reshape(1, 1, 1, -1), 0.0)

    def pool(y):
        return lax.reduce_window(y, -jnp.inf, lax.max,
                                 (1, 2, 2, 1), (1, 2, 2, 1), "VALID")

    y = pool(conv(x, p["wc1"], p["bc1"]))
    y = pool(conv(y, p["wc2"], p["bc2"]))
    f = y.reshape(y.shape[0], -1)
    h = jnp.maximum(f @ p["w1"] + p["b1"], 0.0)
    h = jnp.maximum(h @ p["w2"] + p["b2"], 0.0)
    return h @ p["w3"] + p["b3"]


if __name__ == "__main__":
    # Small shapes: batch=2, RGB input 4x4, features cfg [128,'M',512,'M'] -> 512*1*1.
    N, Cin, H, W = 2, 3, 4, 4
    C1, C2 = 128, 512
    hidden, num_classes = 512, 10

    key = jax.random.PRNGKey(0)
    ks = jax.random.split(key, 6)
    x = jax.random.normal(ks[0], (N, Cin, H, W), jnp.float32)   # PyTorch NCHW input

    params = {
        # Conv weights in HWIO; biases 0 (per _initialize_weights).
        "wc1": jax.random.normal(ks[1], (3, 3, Cin, C1), jnp.float32) * 0.10,
        "bc1": jnp.zeros((C1,), jnp.float32),
        "wc2": jax.random.normal(ks[2], (3, 3, C1, C2), jnp.float32) * 0.03,
        "bc2": jnp.zeros((C2,), jnp.float32),
        "w1": jax.random.normal(ks[3], (C2, hidden), jnp.float32) * 0.04,
        "b1": jnp.zeros((hidden,), jnp.float32),
        "w2": jax.random.normal(ks[4], (hidden, hidden), jnp.float32) * 0.04,
        "b2": jnp.zeros((hidden,), jnp.float32),
        "w3": jax.random.normal(ks[5], (hidden, num_classes), jnp.float32) * 0.04,
        "b3": jnp.zeros((num_classes,), jnp.float32),
        "num_classes": num_classes,
    }

    out = jax.block_until_ready(vgg_forward(x, params))
    ref = jax.block_until_ready(reference_forward(x, params))

    assert out.shape == (N, num_classes), out.shape
    max_err = float(jnp.max(jnp.abs(out - ref)))
    # bf16 MXU operands vs f32 reference -> small numeric drift expected.
    assert jnp.allclose(out, ref, rtol=5e-2, atol=1e-2), max_err
    print("KERNEL_OK")
</pallas_src>

<mosaic_0001>
module attributes {stable_mosaic.version = 11 : i64} {
  func.func @conv3x3_relu_kernel(%arg0: i32, %arg1: memref<1x4x4x3xf32, #tpu.memory_space<vmem>>, %arg2: memref<27x128xbf16, #tpu.memory_space<vmem>>, %arg3: memref<1x128xf32, #tpu.memory_space<vmem>>, %arg4: memref<1x4x4x128xf32, #tpu.memory_space<vmem>>) attributes {dimension_semantics = [#tpu.dimension_semantics<parallel>], iteration_bounds = array<i64: 2>, scalar_prefetch = 0 : i64, scratch_operands = 0 : i64, tpu.core_type = #tpu.core_type<tc>, window_params = [{transform_indices = @transform_0, window_bounds = array<i64: 1, 4, 4, 3>}, {pipeline_mode = #tpu.pipeline_mode<synchronous>, transform_indices = @transform_1, window_bounds = array<i64: 27, 128>}, {pipeline_mode = #tpu.pipeline_mode<synchronous>, transform_indices = @transform_2, window_bounds = array<i64: 1, 128>}, {transform_indices = @transform_3, window_bounds = array<i64: 1, 4, 4, 128>}]} {
    %c0 = arith.constant 0 : index
    %c0_0 = arith.constant 0 : index
    %c0_1 = arith.constant 0 : index
    %c0_2 = arith.constant 0 : index
    %0 = vector.load %arg1[%c0, %c0_0, %c0_1, %c0_2] : memref<1x4x4x3xf32, #tpu.memory_space<vmem>>, vector<1x4x4x3xf32>
    %cst = arith.constant 0.000000e+00 : f32
    %1 = vector.broadcast %cst : f32 to vector<1x1x4x3xf32>
    %2 = tpu.concatenate %1, %0, %1 in 1 : vector<1x1x4x3xf32>, vector<1x4x4x3xf32>, vector<1x1x4x3xf32> -> vector<1x6x4x3xf32>
    %cst_3 = arith.constant 0.000000e+00 : f32
    %3 = vector.broadcast %cst_3 : f32 to vector<1x6x1x3xf32>
    %4 = tpu.concatenate %3, %2, %3 in 2 : vector<1x6x1x3xf32>, vector<1x6x4x3xf32>, vector<1x6x1x3xf32> -> vector<1x6x6x3xf32>
    %5 = vector.extract_strided_slice %4 {offsets = [0, 0, 0, 0], sizes = [1, 4, 4, 3], strides = [1, 1, 1, 1]} : vector<1x6x6x3xf32> to vector<1x4x4x3xf32>
    %6 = vector.extract_strided_slice %4 {offsets = [0, 0, 1, 0], sizes = [1, 4, 4, 3], strides = [1, 1, 1, 1]} : vector<1x6x6x3xf32> to vector<1x4x4x3xf32>
    %7 = vector.extract_strided_slice %4 {offsets = [0, 0, 2, 0], sizes = [1, 4, 4, 3], strides = [1, 1, 1, 1]} : vector<1x6x6x3xf32> to vector<1x4x4x3xf32>
    %8 = vector.extract_strided_slice %4 {offsets = [0, 1, 0, 0], sizes = [1, 4, 4, 3], strides = [1, 1, 1, 1]} : vector<1x6x6x3xf32> to vector<1x4x4x3xf32>
    %9 = vector.extract_strided_slice %4 {offsets = [0, 1, 1, 0], sizes = [1, 4, 4, 3], strides = [1, 1, 1, 1]} : vector<1x6x6x3xf32> to vector<1x4x4x3xf32>
    %10 = vector.extract_strided_slice %4 {offsets = [0, 1, 2, 0], sizes = [1, 4, 4, 3], strides = [1, 1, 1, 1]} : vector<1x6x6x3xf32> to vector<1x4x4x3xf32>
    %11 = vector.extract_strided_slice %4 {offsets = [0, 2, 0, 0], sizes = [1, 4, 4, 3], strides = [1, 1, 1, 1]} : vector<1x6x6x3xf32> to vector<1x4x4x3xf32>
    %12 = vector.extract_strided_slice %4 {offsets = [0, 2, 1, 0], sizes = [1, 4, 4, 3], strides = [1, 1, 1, 1]} : vector<1x6x6x3xf32> to vector<1x4x4x3xf32>
    %13 = vector.extract_strided_slice %4 {offsets = [0, 2, 2, 0], sizes = [1, 4, 4, 3], strides = [1, 1, 1, 1]} : vector<1x6x6x3xf32> to vector<1x4x4x3xf32>
    %14 = tpu.concatenate %5, %6, %7, %8, %9, %10, %11, %12, %13 in 3 : vector<1x4x4x3xf32>, vector<1x4x4x3xf32>, vector<1x4x4x3xf32>, vector<1x4x4x3xf32>, vector<1x4x4x3xf32>, vector<1x4x4x3xf32>, vector<1x4x4x3xf32>, vector<1x4x4x3xf32>, vector<1x4x4x3xf32> -> vector<1x4x4x27xf32>
    %15 = vector.shape_cast %14 : vector<1x4x4x27xf32> to vector<16x27xf32>
    %16 = arith.truncf %15 : vector<16x27xf32> to vector<16x27xbf16>
    %c0_4 = arith.constant 0 : index
    %c0_5 = arith.constant 0 : index
    %17 = vector.load %arg2[%c0_4, %c0_5] : memref<27x128xbf16, #tpu.memory_space<vmem>>, vector<27x128xbf16>
    %cst_6 = arith.constant dense<0.000000e+00> : vector<16x128xf32>
    %18 = tpu.matmul %16, %17, %cst_6 {dimension_numbers = #tpu.dot_dimension_numbers<[1], [0], [0], [1], [0, 0, 1, 1], [], []>} : vector<16x27xbf16>, vector<27x128xbf16>, vector<16x128xf32> -> vector<16x128xf32>
    %c0_7 = arith.constant 0 : index
    %c0_8 = arith.constant 0 : index
    %19 = vector.load %arg3[%c0_7, %c0_8] : memref<1x128xf32, #tpu.memory_space<vmem>>, vector<1x128xf32>
    %20 = vector.broadcast %19 : vector<1x128xf32> to vector<16x128xf32>
    %21 = arith.addf %18, %20 : vector<16x128xf32>
    %cst_9 = arith.constant 0.000000e+00 : f32
    %22 = vector.broadcast %cst_9 : f32 to vector<16x128xf32>
    %23 = arith.maximumf %21, %22 : vector<16x128xf32>
    %24 = vector.shape_cast %23 : vector<16x128xf32> to vector<1x4x4x128xf32>
    %c0_10 = arith.constant 0 : index
    %c0_11 = arith.constant 0 : index
    %c0_12 = arith.constant 0 : index
    %c0_13 = arith.constant 0 : index
    %25 = vector.load %arg4[%c0_10, %c0_11, %c0_12, %c0_13] : memref<1x4x4x128xf32, #tpu.memory_space<vmem>>, vector<1x4x4x128xf32>
    tpu.vector_store %arg4[%c0_10, %c0_11, %c0_12, %c0_13], %24 {strides = array<i32>} : memref<1x4x4x128xf32, #tpu.memory_space<vmem>>, vector<1x4x4x128xf32>,
    return
  }
  func.func @transform_0(%arg0: i32) -> (i32, i32, i32, i32) {
    %c0_i32 = arith.constant 0 : i32
    %c0_i32_0 = arith.constant 0 : i32
    %c0_i32_1 = arith.constant 0 : i32
    %c0_i32_2 = arith.constant 0 : i32
    return %arg0, %c0_i32, %c0_i32_0, %c0_i32_1 : i32, i32, i32, i32
  }
  func.func @transform_1(%arg0: i32) -> (i32, i32) {
    %c0_i32 = arith.constant 0 : i32
    %c0_i32_0 = arith.constant 0 : i32
    %c0_i32_1 = arith.constant 0 : i32
    return %c0_i32, %c0_i32_0 : i32, i32
  }
  func.func @transform_2(%arg0: i32) -> (i32, i32) {
    %c0_i32 = arith.constant 0 : i32
    %c0_i32_0 = arith.constant 0 : i32
    %c0_i32_1 = arith.constant 0 : i32
    return %c0_i32, %c0_i32_0 : i32, i32
  }
  func.func @transform_3(%arg0: i32) -> (i32, i32, i32, i32) {
    %c0_i32 = arith.constant 0 : i32
    %c0_i32_0 = arith.constant 0 : i32
    %c0_i32_1 = arith.constant 0 : i32
    %c0_i32_2 = arith.constant 0 : i32
    return %arg0, %c0_i32, %c0_i32_0, %c0_i32_1 : i32, i32, i32, i32
  }
}

</mosaic_0001>

<llo_original>
// kernel: tpu_custom_call.1
$region0: #{tpu_custom_call.1}
  #allocation0 [shape = 'u32[]', space=smem, size = 0x4, offset = 0x4, fixed_abs, tag = 'smem constant byte address 0x4 - core index']
  #allocation1 [shape = 'u32[144,128]{1,0:T(1,128)}', space=vmem, size = 0x12000, scoped, tag = 'internal scratch']
  %s0 = inlined_call_operand.vmem [shape: f32[2,4,4,3], index: 0, kind: input, shape index: {}]
  %s1 = inlined_call_operand.vmem [shape: bf16[27,128], index: 1, kind: input, shape index: {}]
  %s2 = inlined_call_operand.vmem [shape: f32[1,128], index: 2, kind: input, shape index: {}]
  %s3 = inlined_call_operand.hbm [shape: f32[2,4,4,128], index: 3, kind: output, shape index: {}]
  %s4 = sld [smem:[#allocation0]]
  $region45: #{tpu_custom_call.1} parent=0
    _
  %s6 = ssub.s32 1, %s4
  %s7 = scalar_select 0, %s6, %s4
  $region1: #{tpu_custom_call.1} parent=0
    #allocation2 [shape = 'u8[16384]{0}', space=vmem, size = 0x4000, scoped, tag = 'output window, operand 0']
    #allocation3 [shape = 's32[2]{0}', space=sflag, size = 0x8, scoped, tag = 'scoped memory for tpu_custom_call.1']
    %8 = vsyncpa [#allocation3], 0
    %s9 = scalar_lea.sflag [#allocation3], 1
    %10 = vsyncpa %s9, 0
    loop: start=0, step=1, limit=4
    $region2: #{tpu_custom_call.1} parent=1 // loop_pre_header
      _
    $region3: #{tpu_custom_call.1} parent=1 // loop_header
      %s12 = sphi 0, %s16
      %p13 = scmp.ge.s32.totalorder %s12, 4
      %s22 = sphi 0, %s24
      %s25 = sphi 0, %s22
      %s26 = sphi 0, %s25
      %s42 = sphi 0, %s26
      %s46 = sphi 0, %s46
      %s48 = sphi 0, %s46
      %s49 = sphi 0, %s48
      %s63 = sphi 0, %s49
      %s67 = sphi 0, %s67
      %s69 = sphi 0, %s67
      %s70 = sphi 0, %s69
      %s84 = sphi 0, %s70
      %s90 = sphi 0, %s92
      %s93 = sphi 0, %s90
      %s94 = sphi 0, %s93
      %s110 = sphi 0, %s94
    $region4: #{tpu_custom_call.1} parent=1 // loop_header_branch
      %15 = sbr.rel (%p13) target = $region8
    $region5: #{tpu_custom_call.1} parent=1 // loop_body
      %s17 = ssub.s32 %s12, 1
      %s18 = ssub.s32 %s12, 2
      %s19 = sadd.s32 %s12, 1
      %s20 = ssub.s32 %s12, %s19
      %p21 = scmp.eq.s32.totalorder %s20, 0
      %s23 = sadd.s32 %s22, 1
      %s24 = scalar_select %p21, %s22, %s23
      %p27 = pneg %p21
      %p28 = scmp.eq.s32.totalorder %s12, 1
      %p29 = por %p27, %p28
      %p30 = scmp.ne.s32.totalorder %s22, %s25
      %p31 = scmp.eq.s32.totalorder %s12, 0
      %p32 = por %p30, %p31
      %p33 = scmp.ne.s32.totalorder %s22, %s25
      %p34 = scmp.eq.s32.totalorder %s17, 1
      %p35 = por %p33, %p34
      %p36 = scmp.ne.s32.totalorder %s25, %s26
      %p37 = scmp.eq.s32.totalorder %s17, 0
      %p38 = por %p36, %p37
      %p39 = scmp.ne.s32.totalorder %s25, %s26
      %p40 = scmp.eq.s32.totalorder %s18, 1
      %p41 = por %p39, %p40
      %p43 = scmp.ne.s32.totalorder %s26, %s42
      %p44 = scmp.eq.s32.totalorder %s18, 0
      %p45 = por %p43, %p44
      %s47 = sadd.s32 %s46, 1
      %p50 = scmp.eq.s32.totalorder %s12, 1
      %p51 = scmp.ne.s32.totalorder %s46, %s48
      %p52 = scmp.eq.s32.totalorder %s12, 0
      %p53 = por %p51, %p52
      %p54 = scmp.ne.s32.totalorder %s46, %s48
      %p55 = scmp.eq.s32.totalorder %s17, 1
      %p56 = por %p54, %p55
      %p57 = scmp.ne.s32.totalorder %s48, %s49
      %p58 = scmp.eq.s32.totalorder %s17, 0
      %p59 = por %p57, %p58
      %p60 = scmp.ne.s32.totalorder %s48, %s49
      %p61 = scmp.eq.s32.totalorder %s18, 1
      %p62 = por %p60, %p61
      %p64 = scmp.ne.s32.totalorder %s49, %s63
      %p65 = scmp.eq.s32.totalorder %s18, 0
      %p66 = por %p64, %p65
      %s68 = sadd.s32 %s67, 1
      %p71 = scmp.eq.s32.totalorder %s12, 1
      %p72 = scmp.ne.s32.totalorder %s67, %s69
      %p73 = scmp.eq.s32.totalorder %s12, 0
      %p74 = por %p72, %p73
      %p75 = scmp.ne.s32.totalorder %s67, %s69
      %p76 = scmp.eq.s32.totalorder %s17, 1
      %p77 = por %p75, %p76
      %p78 = scmp.ne.s32.totalorder %s69, %s70
      %p79 = scmp.eq.s32.totalorder %s17, 0
      %p80 = por %p78, %p79
      %p81 = scmp.ne.s32.totalorder %s69, %s70
      %p82 = scmp.eq.s32.totalorder %s18, 1
      %p83 = por %p81, %p82
      %p85 = scmp.ne.s32.totalorder %s70, %s84
      %p86 = scmp.eq.s32.totalorder %s18, 0
      %p87 = por %p85, %p86
      %s88 = ssub.s32 %s12, %s19
      %p89 = scmp.eq.s32.totalorder %s88, 0
      %s91 = sadd.s32 %s90, 1
      %s92 = scalar_select %p89, %s90, %s91
      %p95 = pneg %p89
      %p96 = scmp.eq.s32.totalorder %s12, 1
      %p97 = por %p95, %p96
      %p98 = scmp.ne.s32.totalorder %s90, %s93
      %p99 = scmp.eq.s32.totalorder %s12, 0
      %p100 = por %p98, %p99
      %p101 = scmp.ne.s32.totalorder %s90, %s93
      %p102 = scmp.eq.s32.totalorder %s17, 1
      %p103 = por %p101, %p102
      %p104 = scmp.ne.s32.totalorder %s93, %s94
      %p105 = scmp.eq.s32.totalorder %s17, 0
      %p106 = por %p104, %p105
      %p107 = scmp.ne.s32.totalorder %s93, %s94
      %p108 = scmp.eq.s32.totalorder %s18, 1
      %p109 = por %p107, %p108
      %p111 = scmp.ne.s32.totalorder %s94, %s110
      %p112 = scmp.eq.s32.totalorder %s18, 0
      %p113 = por %p111, %p112
      %p114 = scmp.le.s32.totalorder 1, %s12
      %p115 = scmp.lt.s32.totalorder %s12, 3
      %p116 = pnand %p114, %p115
      %p117 = pneg %p116
      // Predicated region
      $region9: #{tpu_custom_call.1} parent=5 // pred_check
        _
      $region10: #{tpu_custom_call.1} parent=5 // pred_check_branch
        %119 = sbr.rel (%p116) target = $region12
      $region11: #{tpu_custom_call.1} parent=5 // pred_region
        %s120 = ssub.s32 %s12, 1
        // Predicated region
        $region13: #{tpu_custom_call.1} parent=11 // pred_check
          %p121 = pneg %p59
        $region14: #{tpu_custom_call.1} parent=11 // pred_check_branch
          %123 = sbr.rel (%p121) target = $region16
        $region15: #{tpu_custom_call.1} parent=11 // pred_region
          _
        $region16: #{tpu_custom_call.1} parent=11 // pred_fallthru
          _
        // Predicated region
        $region17: #{tpu_custom_call.1} parent=11 // pred_check
          %p124 = pneg %p80
        $region18: #{tpu_custom_call.1} parent=11 // pred_check_branch
          %126 = sbr.rel (%p124) target = $region20
        $region19: #{tpu_custom_call.1} parent=11 // pred_region
          _
        $region20: #{tpu_custom_call.1} parent=11 // pred_fallthru
          _
      $region12: #{tpu_custom_call.1} parent=5 // pred_fallthru
        _
      %p127 = scmp.lt.s32.totalorder %s12, 2
      // Predicated region
      $region21: #{tpu_custom_call.1} parent=5 // pred_check
        %p128 = pneg %p127
      $region22: #{tpu_custom_call.1} parent=5 // pred_check_branch
        %130 = sbr.rel (%p128) target = $region24
      $region23: #{tpu_custom_call.1} parent=5 // pred_region
        // Predicated region
        $region25: #{tpu_custom_call.1} parent=23 // pred_check
          %p131 = pneg %p32
        $region26: #{tpu_custom_call.1} parent=23 // pred_check_branch
          %133 = sbr.rel (%p131) target = $region28
        $region27: #{tpu_custom_call.1} parent=23 // pred_region
          %p134 = scmp.lt.s32.totalorder %s12, 1
          %s135 = scalar_select %p134, %s12, 1
          %s136 = smul.addr %s135, 4
          %s137 = smul.addr %s136, 4
          %s138 = scalar_lea.vmem %s0, %s137
        $region28: #{tpu_custom_call.1} parent=23 // pred_fallthru
          _
      $region24: #{tpu_custom_call.1} parent=5 // pred_fallthru
        _
      %p139 = scmp.le.s32.totalorder 1, %s12
      %p140 = scmp.lt.s32.totalorder %s12, 3
      %p141 = pnand %p139, %p140
      %p142 = pneg %p141
      // Predicated region
      $region29: #{tpu_custom_call.1} parent=5 // pred_check
        _
      $region30: #{tpu_custom_call.1} parent=5 // pred_check_branch
        %144 = sbr.rel (%p141) target = $region32
      $region31: #{tpu_custom_call.1} parent=5 // pred_region
        %s145 = ssub.s32 %s12, 1
        %p146 = scmp.lt.s32.totalorder %s17, 1
        %s147 = scalar_select %p146, %s17, 1
        %s148 = smul.addr %s147, 4
        %s149 = smul.addr %s148, 4
        %s150 = scalar_lea.vmem %s0, %s149
        %p151 = pneg %p38
        %p152 = pneg %p35
        %p153 = pneg %p59
        %p154 = pneg %p56
        %p155 = pneg %p80
        %p156 = pneg %p77
        %p157 = pneg %p106
        %p158 = pneg %p103
        %s159 = sand.u32 %s93, 1
        %s160 = scalar_lea.sflag [#allocation3], %s159
        %s161 = sand.u32 %s93, 1
        %s162 = smul.addr %s161, 16
        %s163 = scalar_lea.vmem [#allocation2], %s162
        %p164 = scmp.lt.s32.totalorder %s17, 1
        %s165 = scalar_select %p164, %s17, 1
        %s166 = smul.addr %s165, 4
        %s167 = smul.addr %s166, 4
        %s168 = scalar_lea.vmem %s0, %s167
        %v170 = vld [vmem:[%s168] sm:$0xf]
        %v171 = vld [vmem:[%s168 + $0x4] sm:$0xf]
        %v172 = vld [vmem:[%s168 + $0x8] sm:$0xf]
        %v173 = vld [vmem:[%s168 + $0xc] sm:$0xf]
        %v179 = vrot.slane 0.0, 7
        %v180 = vrot.slane %v170, 7
        %v181 = vrot.slane %v171, 7
        %v182 = vrot.slane %v172, 7
        %v183 = vrot.slane %v173, 7
        %vm189 = vcmask 1040384
        %v190 = vsel %vm189, 0.0, %v179
        %v191 = vsel %vm189, 0.0, %v180
        %v192 = vsel %vm189, 0.0, %v181
        %v193 = vsel %vm189, 0.0, %v182
        %v194 = vsel %vm189, 0.0, %v183
        %vm195 = vcmask 1044480
        %v196 = vsel %vm195, %v190, 0.0
        %v197 = vsel %vm195, %v191, 0.0
        %v198 = vsel %vm195, %v192, 0.0
        %v199 = vsel %vm195, %v193, 0.0
        %v200 = vsel %vm195, %v194, 0.0
        %v205 = vrot.slane %v196, 1
        %v206 = vrot.slane %v197, 1
        %v207 = vrot.slane %v198, 1
        %v208 = vrot.slane %v199, 1
        %209 = vrot.lane.b32.xlu0 %v205, 3
        %v210 = vpop.permute.xlu0 %209
        %211 = vrot.lane.b32.xlu0 %v206, 3
        %v212 = vpop.permute.xlu0 %211
        %213 = vrot.lane.b32.xlu0 %v207, 3
        %v214 = vpop.permute.xlu0 %213
        %215 = vrot.lane.b32.xlu0 %v208, 3
        %v216 = vpop.permute.xlu0 %215
        %v221 = vrot.slane %v196, 2
        %v222 = vrot.slane %v197, 2
        %v223 = vrot.slane %v198, 2
        %v224 = vrot.slane %v199, 2
        %225 = vrot.lane.b32.xlu0 %v221, 6
        %v226 = vpop.permute.xlu0 %225
        %227 = vrot.lane.b32.xlu0 %v222, 6
        %v228 = vpop.permute.xlu0 %227
        %229 = vrot.lane.b32.xlu0 %v223, 6
        %v230 = vpop.permute.xlu0 %229
        %231 = vrot.lane.b32.xlu0 %v224, 6
        %v232 = vpop.permute.xlu0 %231
        %238 = vrot.lane.b32.xlu0 %v197, 9
        %v239 = vpop.permute.xlu0 %238
        %240 = vrot.lane.b32.xlu0 %v198, 9
        %v241 = vpop.permute.xlu0 %240
        %242 = vrot.lane.b32.xlu0 %v199, 9
        %v243 = vpop.permute.xlu0 %242
        %244 = vrot.lane.b32.xlu0 %v200, 9
        %v245 = vpop.permute.xlu0 %244
        %v250 = vrot.slane %v200, 1
        %251 = vrot.lane.b32.xlu0 %v206, 12
        %v252 = vpop.permute.xlu0 %251
        %253 = vrot.lane.b32.xlu0 %v207, 12
        %v254 = vpop.permute.xlu0 %253
        %255 = vrot.lane.b32.xlu0 %v208, 12
        %v256 = vpop.permute.xlu0 %255
        %257 = vrot.lane.b32.xlu0 %v250, 12
        %v258 = vpop.permute.xlu0 %257
        %v263 = vrot.slane %v200, 2
        %264 = vrot.lane.b32.xlu0 %v222, 15
        %v265 = vpop.permute.xlu0 %264
        %266 = vrot.lane.b32.xlu0 %v223, 15
        %v267 = vpop.permute.xlu0 %266
        %268 = vrot.lane.b32.xlu0 %v224, 15
        %v269 = vpop.permute.xlu0 %268
        %270 = vrot.lane.b32.xlu0 %v263, 15
        %v271 = vpop.permute.xlu0 %270
        %276 = vrot.lane.b32.xlu0 %v198, 18
        %v277 = vpop.permute.xlu0 %276
        %278 = vrot.lane.b32.xlu0 %v199, 18
        %v279 = vpop.permute.xlu0 %278
        %280 = vrot.lane.b32.xlu0 %v200, 18
        %v281 = vpop.permute.xlu0 %280
        %282 = vrot.lane.b32.xlu0 %v196, 18
        %v283 = vpop.permute.xlu0 %282
        %288 = vrot.lane.b32.xlu0 %v207, 21
        %v289 = vpop.permute.xlu0 %288
        %290 = vrot.lane.b32.xlu0 %v208, 21
        %v291 = vpop.permute.xlu0 %290
        %292 = vrot.lane.b32.xlu0 %v250, 21
        %v293 = vpop.permute.xlu0 %292
        %294 = vrot.lane.b32.xlu0 %v205, 21
        %v295 = vpop.permute.xlu0 %294
        %300 = vrot.lane.b32.xlu0 %v223, 24
        %v301 = vpop.permute.xlu0 %300
        %302 = vrot.lane.b32.xlu0 %v224, 24
        %v303 = vpop.permute.xlu0 %302
        %304 = vrot.lane.b32.xlu0 %v263, 24
        %v305 = vpop.permute.xlu0 %304
        %306 = vrot.lane.b32.xlu0 %v221, 24
        %v307 = vpop.permute.xlu0 %306
        %vm312 = vcmask 23552
        %v313 = vsel %vm312, %v196, %v210
        %v314 = vsel %vm312, %v197, %v212
        %v315 = vsel %vm312, %v198, %v214
        %v316 = vsel %vm312, %v199, %v216
        %vm317 = vcmask 48128
        %v318 = vsel %vm317, %v313, %v226
        %v319 = vsel %vm317, %v314, %v228
        %v320 = vsel %vm317, %v315, %v230
        %v321 = vsel %vm317, %v316, %v232
        %vm322 = vcmask 72704
        %v323 = vsel %vm322, %v318, %v239
        %v324 = vsel %vm322, %v319, %v241
        %v325 = vsel %vm322, %v320, %v243
        %v326 = vsel %vm322, %v321, %v245
        %vm327 = vcmask 97280
        %v328 = vsel %vm327, %v323, %v252
        %v329 = vsel %vm327, %v324, %v254
        %v330 = vsel %vm327, %v325, %v256
        %v331 = vsel %vm327, %v326, %v258
        %vm332 = vcmask 121856
        %v333 = vsel %vm332, %v328, %v265
        %v334 = vsel %vm332, %v329, %v267
        %v335 = vsel %vm332, %v330, %v269
        %v336 = vsel %vm332, %v331, %v271
        %vm337 = vcmask 146432
        %v338 = vsel %vm337, %v333, %v277
        %v339 = vsel %vm337, %v334, %v279
        %v340 = vsel %vm337, %v335, %v281
        %v341 = vsel %vm337, %v336, %v283
        %vm342 = vcmask 171008
        %v343 = vsel %vm342, %v338, %v289
        %v344 = vsel %vm342, %v339, %v291
        %v345 = vsel %vm342, %v340, %v293
        %v346 = vsel %vm342, %v341, %v295
        %vm347 = vcmask 195584
        %v348 = vsel %vm347, %v343, %v301
        %v349 = vsel %vm347, %v344, %v303
        %v350 = vsel %vm347, %v345, %v305
        %v351 = vsel %vm347, %v346, %v307
        %v356 = vcombine.low %v348, %v349
        %v357 = vcombine.low %v350, %v351
        %v360 = vpack.c.bf16 %v357, %v356
        %v361 = vld [vmem:[%s1] sm:$0xf]
        %v362 = vld [vmem:[%s1 + $0x4] sm:$0xf]
        %v363 = vld [vmem:[%s1 + $0x8] sm:$0xf]
        %v364 = vld [vmem:[%s1 + $0xc] sm:$0x3]
        %v365 = vld [vmem:[%s2] sm:$0x1]
        %v367 = vlaneseq
        %v368 = vshrl.u32 %v367, 7
        %v369 = vsub.s32 0, %v368
        %v370 = vrot.slane %v365, %v369
        %v376 = vunpack.c.l.b16 %v361
        %v377 = vunpack.c.l.b16 %v362
        %v378 = vunpack.c.l.b16 %v363
        %v379 = vunpack.c.l.b16 %v364
        %v380 = vpack.c.b16 %v377, %v376
        %v381 = vpack.c.b16 %v379, %v378
        %vm383 = vcmask 220160
        %v385 = vsel %vm383, %v360, 0
        %vm387 = vcmask 1045504
        %v388 = vsel %vm195, 4294967295, 65535
        %v389 = vsel %vm387, %v388, 0
        %v391 = vand.u32 %v381, %v389
        %393 = vmatprep.subr.bf16.mxu0 0
        %394 = vmatpush1.bf16.msra.mxu0 0
        %395 = vmatprep.subr.bf16.mxu0 0
        %396 = vmatpush1.bf16.msra.mxu0 0
        %397 = vmatprep.subr.bf16.mxu0 0
        %398 = vmatpush1.bf16.msra.mxu0 0
        %399 = vmatprep.subr.bf16.mxu0 0
        %400 = vmatpush1.bf16.msra.mxu0 0
        %401 = vmatprep.subr.bf16.mxu0 0
        %402 = vmatpush1.bf16.msra.mxu0 0
        %403 = vmatprep.subr.bf16.mxu0 0
        %404 = vmatpush1.bf16.msra.mxu0 0
        %405 = vmatprep.subr.bf16.mxu0 0
        %406 = vmatpush1.bf16.msra.mxu0 %v391
        %407 = vmatprep.subr.bf16.mxu0 0
        %408 = vmatpush1.bf16.msra.mxu0 %v380
        %409 = vmatprep.subr.bf16.mxu0 0
        %410 = vmatpush2.bf16.msra.mxu0 0
        %411 = vmatprep.subr.bf16.mxu0 0
        %412 = vmatpush2.bf16.msra.mxu0 0
        %413 = vmatprep.subr.bf16.mxu0 0
        %414 = vmatpush2.bf16.msra.mxu0 0
        %415 = vmatprep.subr.bf16.mxu0 0
        %416 = vmatpush2.bf16.msra.mxu0 0
        %417 = vmatprep.subr.bf16.mxu0 0
        %418 = vmatpush2.bf16.msra.mxu0 0
        %419 = vmatprep.subr.bf16.mxu0 0
        %420 = vmatpush2.bf16.msra.mxu0 0
        %421 = vmatprep.subr.bf16.mxu0 0
        %422 = vmatpush2.bf16.msra.mxu0 0
        %423 = vmatprep.subr.bf16.mxu0 0
        %424 = vmatpush2.bf16.msra.mxu0 0
        %425 = vmatprep.mubr.bf16.mxu0 0
        %426 = vmatmul.mubr.bf16.gmra.mxu0 %v385
        %v427 = vpop.f32.mrf.mxu0
        %v428 = vadd.f32 %v370, %v427
        %v429 = vpop.f32.mrf.mxu0
        %v430 = vpop.f32.mrf.mxu0
        %v431 = vadd.f32 %v370, %v430
        %v432 = vpop.f32.mrf.mxu0
        %433 = vdwg.mxu0
        %v434 = vmax.f32 %v428, 0.0
        %v435 = vmax.f32 %v431, 0.0
        %v438 = vcombine.high %v434, %v434
        %v439 = vcombine.high %v435, %v435
        %442 = vst [vmem:[%s163] sm:$0xf] %v434
        %443 = vst [vmem:[%s163 + $0x4] sm:$0xf] %v438
        %444 = vst [vmem:[%s163 + $0x8] sm:$0xf] %v435
        %445 = vst [vmem:[%s163 + $0xc] sm:$0xf] %v439
        %s446 = sand.u32 %s93, 1
        %s447 = scalar_lea.sflag [#allocation3], %s446
        %s448 = sand.u32 %s93, 1
        %s449 = smul.addr %s448, 16
        %s450 = scalar_lea.vmem [#allocation2], %s449
        // Predicated region
        $region33: #{tpu_custom_call.1} parent=31 // pred_check
          %p451 = pneg %p103
        $region34: #{tpu_custom_call.1} parent=31 // pred_check_branch
          %453 = sbr.rel (%p451) target = $region36
        $region35: #{tpu_custom_call.1} parent=31 // pred_region
          %s455 = ssub.s32 256, 256
          %456 = vsyncadd %s447, %s455
          %s457 = smul.addr %s17, 4
          %s458 = smul.addr %s457, 64
          %s459 = scalar_lea.hbm %s3, %s458
          %s460 = sshll.u32 %s450, 4
          %s461 = int_to_ptr.vmem [resolvable:$true] %s460
          %466 = dma.vmem_to_hbm [thread:$0]  %s461, 256, %s459, %s447, 64, 64, 4
        $region36: #{tpu_custom_call.1} parent=31 // pred_fallthru
          _
      $region32: #{tpu_custom_call.1} parent=5 // pred_fallthru
        _
      %p467 = scmp.le.s32.totalorder 2, %s12
      // Predicated region
      $region37: #{tpu_custom_call.1} parent=5 // pred_check
        %p468 = pneg %p467
      $region38: #{tpu_custom_call.1} parent=5 // pred_check_branch
        %470 = sbr.rel (%p468) target = $region40
      $region39: #{tpu_custom_call.1} parent=5 // pred_region
        %s471 = ssub.s32 %s12, 2
        // Predicated region
        $region41: #{tpu_custom_call.1} parent=39 // pred_check
          %p472 = pneg %p109
        $region42: #{tpu_custom_call.1} parent=39 // pred_check_branch
          %474 = sbr.rel (%p472) target = $region44
        $region43: #{tpu_custom_call.1} parent=39 // pred_region
          %s475 = sand.u32 %s94, 1
          %s476 = scalar_lea.sflag [#allocation3], %s475
          %s477 = sand.u32 %s94, 1
          %s478 = smul.addr %s477, 16
          %s479 = scalar_lea.vmem [#allocation2], %s478
          %480 = dma.done %s476, 256
        $region44: #{tpu_custom_call.1} parent=39 // pred_fallthru
          _
      $region40: #{tpu_custom_call.1} parent=5 // pred_fallthru
        _
    $region6: #{tpu_custom_call.1} parent=1 // loop_footer
      %s16 = sadd.s32 1, %s12
    $region7: #{tpu_custom_call.1} parent=1 // loop_footer_branch
      %11 = sbr.rel target = $region3
    $region8: #{tpu_custom_call.1} parent=1 // loop_exit
      _
    %481 = vsyncpa [#allocation3], 1
    %s482 = scalar_lea.sflag [#allocation3], 1
    %483 = vsyncpa %s482, 1

</llo_original>
